<compile_context>
chip_gen: v5e
topology: v5e:2x2
jax: 0.10.0
libtpu: 0.0.40
codegen_flags: <defaults>
</compile_context>

<pallas_src>
import functools

import jax
import jax.numpy as jnp
from jax.experimental import pallas as pl
from jax.experimental.pallas import tpu as pltpu


def _rnn_tanh_kernel(x_ref, wih_t_ref, whh_t_ref, out_ref, *, T, B):
    """Single-invocation RNN-tanh recurrence.

    x_ref:     (T*B, I)  flattened seq-first input, whole sequence in VMEM
    wih_t_ref: (I, H)    W_ih^T (resident)
    whh_t_ref: (H, H)    W_hh^T (resident)
    out_ref:   (T*B, H)  stacked hidden states
    """
    H = out_ref.shape[-1]

    # Hoisted input projection: one MXU matmul for all time steps.
    xp = jnp.dot(x_ref[...], wih_t_ref[...],
                 preferred_element_type=jnp.float32)          # (T*B, H)
    whh_t = whh_t_ref[...]                                     # (H, H)

    h = jnp.zeros((B, H), jnp.float32)                         # h_0 = 0 (hx is zeros)
    for t in range(T):                                         # T is static -> fully unrolled
        pre = xp[t * B:(t + 1) * B, :] + jnp.dot(
            h, whh_t, preferred_element_type=jnp.float32)      # (B, H)
        h = jnp.tanh(pre)
        out_ref[t * B:(t + 1) * B, :] = h.astype(out_ref.dtype)  # VMEM store; single HBM writeback at end


def recurrent_net_forward(x, w_ih, w_hh):
    """x: (T, B, I); w_ih: (H, I); w_hh: (H, H).  Returns (out (T,B,H), hid (1,B,H))."""
    T, B, I = x.shape
    H = w_hh.shape[0]

    # One-time parameter glue in the wrapper: transpose weights so the kernel
    # runs plain (M, K) @ (K, N) matmuls; flatten (T, B, I) -> (T*B, I).
    wih_t = jnp.transpose(w_ih)          # (I, H)
    whh_t = jnp.transpose(w_hh)          # (H, H)
    x_flat = x.reshape(T * B, I)

    kernel = functools.partial(_rnn_tanh_kernel, T=T, B=B)

    out_flat = pl.pallas_call(
        kernel,
        out_shape=jax.ShapeDtypeStruct((T * B, H), x.dtype),
        in_specs=[
            pl.BlockSpec(memory_space=pltpu.MemorySpace.VMEM),   # x (whole sequence)
            pl.BlockSpec(memory_space=pltpu.MemorySpace.VMEM),   # W_ih^T
            pl.BlockSpec(memory_space=pltpu.MemorySpace.VMEM),   # W_hh^T
        ],
        out_specs=pl.BlockSpec(memory_space=pltpu.MemorySpace.VMEM),
    )(x_flat, wih_t, whh_t)

    out = out_flat.reshape(T, B, H)
    hid = out[-1:]                        # (1, B, H) final hidden, same as PyTorch hid
    return out, hid


def rnn_tanh_reference(x, w_ih, w_hh):
    """Pure-JAX reference for correctness check."""
    T, B, I = x.shape
    H = w_hh.shape[0]
    h0 = jnp.zeros((B, H), jnp.float32)

    def step(h, x_t):
        h_new = jnp.tanh(x_t @ w_ih.T + h @ w_hh.T)
        return h_new, h_new

    h_last, outs = jax.lax.scan(step, h0, x)
    return outs, h_last[None]


if __name__ == "__main__":
    # Small shapes consistent with the module: seq=8, batch=1 (hx forces B=1),
    # input_size=16, hidden_size=32.
    T, B, I, H = 8, 1, 16, 32

    key = jax.random.PRNGKey(0)
    k_x, k_hi, k_hh = jax.random.split(key, 3)
    x = jax.random.normal(k_x, (T, B, I), dtype=jnp.float32)
    # torch.rand -> uniform [0, 1)
    w_ih = jax.random.uniform(k_hi, (H, I), dtype=jnp.float32)   # hi_w
    w_hh = jax.random.uniform(k_hh, (H, H), dtype=jnp.float32)   # hh_w

    out, hid = recurrent_net_forward(x, w_ih, w_hh)
    out = jax.block_until_ready(out)
    hid = jax.block_until_ready(hid)

    ref_out, ref_hid = rnn_tanh_reference(x, w_ih, w_hh)
    assert out.shape == (T, B, H) and hid.shape == (1, B, H)
    assert jnp.allclose(out, ref_out, atol=1e-5, rtol=1e-5)
    assert jnp.allclose(hid, ref_hid, atol=1e-5, rtol=1e-5)

    # TODO(synk): LSTM mode (mode_name='LSTM') and the bidirectional path of the
    # module are not exercised by the default forward; only RNN_TANH is implemented.
    print("KERNEL_OK")
</pallas_src>

<mosaic_0001>
module attributes {stable_mosaic.version = 11 : i64} {
  func.func @_rnn_tanh_kernel(%arg0: memref<8x16xf32, #tpu.memory_space<vmem>>, %arg1: memref<16x32xf32, #tpu.memory_space<vmem>>, %arg2: memref<32x32xf32, #tpu.memory_space<vmem>>, %arg3: memref<8x32xf32, #tpu.memory_space<vmem>>) attributes {dimension_semantics = [], scalar_prefetch = 0 : i64, scratch_operands = 0 : i64, tpu.core_type = #tpu.core_type<tc>} {
    %c0 = arith.constant 0 : index
    %c0_0 = arith.constant 0 : index
    %0 = vector.load %arg0[%c0, %c0_0] : memref<8x16xf32, #tpu.memory_space<vmem>>, vector<8x16xf32>
    %c0_1 = arith.constant 0 : index
    %c0_2 = arith.constant 0 : index
    %1 = vector.load %arg1[%c0_1, %c0_2] : memref<16x32xf32, #tpu.memory_space<vmem>>, vector<16x32xf32>
    %cst = arith.constant dense<0.000000e+00> : vector<8x32xf32>
    %2 = tpu.matmul %0, %1, %cst {dimension_numbers = #tpu.dot_dimension_numbers<[1], [0], [0], [1], [0, 0, 1, 1], [], []>} : vector<8x16xf32>, vector<16x32xf32>, vector<8x32xf32> -> vector<8x32xf32>
    %c0_3 = arith.constant 0 : index
    %c0_4 = arith.constant 0 : index
    %3 = vector.load %arg2[%c0_3, %c0_4] : memref<32x32xf32, #tpu.memory_space<vmem>>, vector<32x32xf32>
    %cst_5 = arith.constant 0.000000e+00 : f32
    %4 = vector.broadcast %cst_5 : f32 to vector<1x32xf32>
    %5 = vector.extract_strided_slice %2 {offsets = [0, 0], sizes = [1, 32], strides = [1, 1]} : vector<8x32xf32> to vector<1x32xf32>
    %cst_6 = arith.constant dense<0.000000e+00> : vector<1x32xf32>
    %6 = tpu.matmul %4, %3, %cst_6 {dimension_numbers = #tpu.dot_dimension_numbers<[1], [0], [0], [1], [0, 0, 1, 1], [], []>} : vector<1x32xf32>, vector<32x32xf32>, vector<1x32xf32> -> vector<1x32xf32>
    %7 = arith.addf %5, %6 : vector<1x32xf32>
    %8 = math.tanh %7 : vector<1x32xf32>
    %c0_7 = arith.constant 0 : index
    %c0_8 = arith.constant 0 : index
    %9 = vector.load %arg3[%c0_7, %c0_8] : memref<8x32xf32, #tpu.memory_space<vmem>>, vector<1x32xf32>
    tpu.vector_store %arg3[%c0_7, %c0_8], %8 {strides = array<i32>} : memref<8x32xf32, #tpu.memory_space<vmem>>, vector<1x32xf32>,
    %10 = vector.extract_strided_slice %2 {offsets = [1, 0], sizes = [1, 32], strides = [1, 1]} : vector<8x32xf32> to vector<1x32xf32>
    %cst_9 = arith.constant dense<0.000000e+00> : vector<1x32xf32>
    %11 = tpu.matmul %8, %3, %cst_9 {dimension_numbers = #tpu.dot_dimension_numbers<[1], [0], [0], [1], [0, 0, 1, 1], [], []>} : vector<1x32xf32>, vector<32x32xf32>, vector<1x32xf32> -> vector<1x32xf32>
    %12 = arith.addf %10, %11 : vector<1x32xf32>
    %13 = math.tanh %12 : vector<1x32xf32>
    %c1 = arith.constant 1 : index
    %c0_10 = arith.constant 0 : index
    %14 = vector.load %arg3[%c1, %c0_10] : memref<8x32xf32, #tpu.memory_space<vmem>>, vector<1x32xf32>
    tpu.vector_store %arg3[%c1, %c0_10], %13 {strides = array<i32>} : memref<8x32xf32, #tpu.memory_space<vmem>>, vector<1x32xf32>,
    %15 = vector.extract_strided_slice %2 {offsets = [2, 0], sizes = [1, 32], strides = [1, 1]} : vector<8x32xf32> to vector<1x32xf32>
    %cst_11 = arith.constant dense<0.000000e+00> : vector<1x32xf32>
    %16 = tpu.matmul %13, %3, %cst_11 {dimension_numbers = #tpu.dot_dimension_numbers<[1], [0], [0], [1], [0, 0, 1, 1], [], []>} : vector<1x32xf32>, vector<32x32xf32>, vector<1x32xf32> -> vector<1x32xf32>
    %17 = arith.addf %15, %16 : vector<1x32xf32>
    %18 = math.tanh %17 : vector<1x32xf32>
    %c2 = arith.constant 2 : index
    %c0_12 = arith.constant 0 : index
    %19 = vector.load %arg3[%c2, %c0_12] : memref<8x32xf32, #tpu.memory_space<vmem>>, vector<1x32xf32>
    tpu.vector_store %arg3[%c2, %c0_12], %18 {strides = array<i32>} : memref<8x32xf32, #tpu.memory_space<vmem>>, vector<1x32xf32>,
    %20 = vector.extract_strided_slice %2 {offsets = [3, 0], sizes = [1, 32], strides = [1, 1]} : vector<8x32xf32> to vector<1x32xf32>
    %cst_13 = arith.constant dense<0.000000e+00> : vector<1x32xf32>
    %21 = tpu.matmul %18, %3, %cst_13 {dimension_numbers = #tpu.dot_dimension_numbers<[1], [0], [0], [1], [0, 0, 1, 1], [], []>} : vector<1x32xf32>, vector<32x32xf32>, vector<1x32xf32> -> vector<1x32xf32>
    %22 = arith.addf %20, %21 : vector<1x32xf32>
    %23 = math.tanh %22 : vector<1x32xf32>
    %c3 = arith.constant 3 : index
    %c0_14 = arith.constant 0 : index
    %24 = vector.load %arg3[%c3, %c0_14] : memref<8x32xf32, #tpu.memory_space<vmem>>, vector<1x32xf32>
    tpu.vector_store %arg3[%c3, %c0_14], %23 {strides = array<i32>} : memref<8x32xf32, #tpu.memory_space<vmem>>, vector<1x32xf32>,
    %25 = vector.extract_strided_slice %2 {offsets = [4, 0], sizes = [1, 32], strides = [1, 1]} : vector<8x32xf32> to vector<1x32xf32>
    %cst_15 = arith.constant dense<0.000000e+00> : vector<1x32xf32>
    %26 = tpu.matmul %23, %3, %cst_15 {dimension_numbers = #tpu.dot_dimension_numbers<[1], [0], [0], [1], [0, 0, 1, 1], [], []>} : vector<1x32xf32>, vector<32x32xf32>, vector<1x32xf32> -> vector<1x32xf32>
    %27 = arith.addf %25, %26 : vector<1x32xf32>
    %28 = math.tanh %27 : vector<1x32xf32>
    %c4 = arith.constant 4 : index
    %c0_16 = arith.constant 0 : index
    %29 = vector.load %arg3[%c4, %c0_16] : memref<8x32xf32, #tpu.memory_space<vmem>>, vector<1x32xf32>
    tpu.vector_store %arg3[%c4, %c0_16], %28 {strides = array<i32>} : memref<8x32xf32, #tpu.memory_space<vmem>>, vector<1x32xf32>,
    %30 = vector.extract_strided_slice %2 {offsets = [5, 0], sizes = [1, 32], strides = [1, 1]} : vector<8x32xf32> to vector<1x32xf32>
    %cst_17 = arith.constant dense<0.000000e+00> : vector<1x32xf32>
    %31 = tpu.matmul %28, %3, %cst_17 {dimension_numbers = #tpu.dot_dimension_numbers<[1], [0], [0], [1], [0, 0, 1, 1], [], []>} : vector<1x32xf32>, vector<32x32xf32>, vector<1x32xf32> -> vector<1x32xf32>
    %32 = arith.addf %30, %31 : vector<1x32xf32>
    %33 = math.tanh %32 : vector<1x32xf32>
    %c5 = arith.constant 5 : index
    %c0_18 = arith.constant 0 : index
    %34 = vector.load %arg3[%c5, %c0_18] : memref<8x32xf32, #tpu.memory_space<vmem>>, vector<1x32xf32>
    tpu.vector_store %arg3[%c5, %c0_18], %33 {strides = array<i32>} : memref<8x32xf32, #tpu.memory_space<vmem>>, vector<1x32xf32>,
    %35 = vector.extract_strided_slice %2 {offsets = [6, 0], sizes = [1, 32], strides = [1, 1]} : vector<8x32xf32> to vector<1x32xf32>
    %cst_19 = arith.constant dense<0.000000e+00> : vector<1x32xf32>
    %36 = tpu.matmul %33, %3, %cst_19 {dimension_numbers = #tpu.dot_dimension_numbers<[1], [0], [0], [1], [0, 0, 1, 1], [], []>} : vector<1x32xf32>, vector<32x32xf32>, vector<1x32xf32> -> vector<1x32xf32>
    %37 = arith.addf %35, %36 : vector<1x32xf32>
    %38 = math.tanh %37 : vector<1x32xf32>
    %c6 = arith.constant 6 : index
    %c0_20 = arith.constant 0 : index
    %39 = vector.load %arg3[%c6, %c0_20] : memref<8x32xf32, #tpu.memory_space<vmem>>, vector<1x32xf32>
    tpu.vector_store %arg3[%c6, %c0_20], %38 {strides = array<i32>} : memref<8x32xf32, #tpu.memory_space<vmem>>, vector<1x32xf32>,
    %40 = vector.extract_strided_slice %2 {offsets = [7, 0], sizes = [1, 32], strides = [1, 1]} : vector<8x32xf32> to vector<1x32xf32>
    %cst_21 = arith.constant dense<0.000000e+00> : vector<1x32xf32>
    %41 = tpu.matmul %38, %3, %cst_21 {dimension_numbers = #tpu.dot_dimension_numbers<[1], [0], [0], [1], [0, 0, 1, 1], [], []>} : vector<1x32xf32>, vector<32x32xf32>, vector<1x32xf32> -> vector<1x32xf32>
    %42 = arith.addf %40, %41 : vector<1x32xf32>
    %43 = math.tanh %42 : vector<1x32xf32>
    %c7 = arith.constant 7 : index
    %c0_22 = arith.constant 0 : index
    %44 = vector.load %arg3[%c7, %c0_22] : memref<8x32xf32, #tpu.memory_space<vmem>>, vector<1x32xf32>
    tpu.vector_store %arg3[%c7, %c0_22], %43 {strides = array<i32>} : memref<8x32xf32, #tpu.memory_space<vmem>>, vector<1x32xf32>,
    return
  }
}

</mosaic_0001>

<llo_original>
// kernel: tpu_custom_call.1
$region0: #{tpu_custom_call.1}
  #allocation0 [shape = 'u32[]', space=smem, size = 0x4, offset = 0x4, fixed_abs, tag = 'smem constant byte address 0x4 - core index']
  #allocation1 [shape = 'u32[72,128]{1,0:T(1,128)}', space=vmem, size = 0x9000, scoped, tag = 'internal scratch']
  %s0 = inlined_call_operand.hbm [shape: f32[8,16], index: 0, kind: input, shape index: {}]
  %s1 = inlined_call_operand.hbm [shape: f32[16,32], index: 1, kind: input, shape index: {}]
  %s2 = inlined_call_operand.hbm [shape: f32[32,32], index: 2, kind: input, shape index: {}]
  %s3 = inlined_call_operand.hbm [shape: f32[8,32], index: 3, kind: output, shape index: {}]
  %s4 = sld [smem:[#allocation0]]
  $region34: #{tpu_custom_call.1} parent=0
    _
  %s6 = ssub.s32 1, %s4
  %s7 = scalar_select 0, %s6, %s4
  $region1: #{tpu_custom_call.1} parent=0
    #allocation2 [shape = 'u8[4096]{0}', space=vmem, size = 0x1000, scoped, tag = 'input window, operand 0, single buffered']
    #allocation3 [shape = 's32[1]{0}', space=sflag, size = 0x4, scoped, tag = 'scoped memory for tpu_custom_call.1']
    #allocation4 [shape = 's32[1]{0}', space=sflag, size = 0x4, scoped, tag = 'scoped memory for tpu_custom_call.1']
    #allocation5 [shape = 'u8[8192]{0}', space=vmem, size = 0x2000, scoped, tag = 'input window, operand 1, single buffered']
    #allocation6 [shape = 's32[1]{0}', space=sflag, size = 0x4, scoped, tag = 'scoped memory for tpu_custom_call.1']
    #allocation7 [shape = 'u8[16384]{0}', space=vmem, size = 0x4000, scoped, tag = 'input window, operand 2, single buffered']
    #allocation8 [shape = 'u8[4096]{0}', space=vmem, size = 0x1000, scoped, tag = 'output window, operand 0, single buffered']
    %8 = vsyncpa [#allocation3], 0
    %9 = vsyncpa [#allocation6], 0
    %10 = vsyncpa [#allocation4], 0
    // Predicated region
    $region2: #{tpu_custom_call.1} parent=1 // pred_check
      _
    $region3: #{tpu_custom_call.1} parent=1 // pred_check_branch
      %12 = sbr.rel (0) target = $region5
    $region4: #{tpu_custom_call.1} parent=1 // pred_region
      %14 = vsyncadd [#allocation3], 0
      %s16 = sshll.u32 %s0, 4
      %s17 = int_to_ptr.hbm [resolvable:$true] %s16
      %s18 = sshll.u32 [#allocation2], 4
      %s19 = int_to_ptr.vmem [resolvable:$true] %s18
      %21 = dma.hbm_to_vmem [thread:$0]  %s17, 128, %s19, [#allocation3]
    $region5: #{tpu_custom_call.1} parent=1 // pred_fallthru
      _
    // Predicated region
    $region6: #{tpu_custom_call.1} parent=1 // pred_check
      _
    $region7: #{tpu_custom_call.1} parent=1 // pred_check_branch
      %23 = sbr.rel (0) target = $region9
    $region8: #{tpu_custom_call.1} parent=1 // pred_region
      %25 = vsyncadd [#allocation6], 0
      %s26 = sshll.u32 %s1, 4
      %s27 = int_to_ptr.hbm [resolvable:$true] %s26
      %s28 = sshll.u32 [#allocation5], 4
      %s29 = int_to_ptr.vmem [resolvable:$true] %s28
      %34 = dma.hbm_to_vmem [thread:$0]  %s27, 256, %s29, [#allocation6], 128, 128, 8
    $region9: #{tpu_custom_call.1} parent=1 // pred_fallthru
      _
    // Predicated region
    $region10: #{tpu_custom_call.1} parent=1 // pred_check
      _
    $region11: #{tpu_custom_call.1} parent=1 // pred_check_branch
      %36 = sbr.rel (0) target = $region13
    $region12: #{tpu_custom_call.1} parent=1 // pred_region
      %38 = vsyncadd [#allocation6], 0
      %s39 = sshll.u32 %s2, 4
      %s40 = int_to_ptr.hbm [resolvable:$true] %s39
      %s41 = sshll.u32 [#allocation7], 4
      %s42 = int_to_ptr.vmem [resolvable:$true] %s41
      %47 = dma.hbm_to_vmem [thread:$0]  %s40, 512, %s42, [#allocation6], 128, 128, 8
    $region13: #{tpu_custom_call.1} parent=1 // pred_fallthru
      _
    // Predicated region
    $region14: #{tpu_custom_call.1} parent=1 // pred_check
      _
    $region15: #{tpu_custom_call.1} parent=1 // pred_check_branch
      %49 = sbr.rel (0) target = $region17
    $region16: #{tpu_custom_call.1} parent=1 // pred_region
      %51 = dma.done [#allocation3], 128
    $region17: #{tpu_custom_call.1} parent=1 // pred_fallthru
      _
    // Predicated region
    $region18: #{tpu_custom_call.1} parent=1 // pred_check
      _
    $region19: #{tpu_custom_call.1} parent=1 // pred_check_branch
      %53 = sbr.rel (0) target = $region21
    $region20: #{tpu_custom_call.1} parent=1 // pred_region
      %55 = dma.done [#allocation6], 256
    $region21: #{tpu_custom_call.1} parent=1 // pred_fallthru
      _
    // Predicated region
    $region22: #{tpu_custom_call.1} parent=1 // pred_check
      _
    $region23: #{tpu_custom_call.1} parent=1 // pred_check_branch
      %57 = sbr.rel (0) target = $region25
    $region24: #{tpu_custom_call.1} parent=1 // pred_region
      %59 = dma.done [#allocation6], 512
    $region25: #{tpu_custom_call.1} parent=1 // pred_fallthru
      _
    %v60 = vld [vmem:[#allocation2] sm:$0xff]
    %v61 = vld [vmem:[#allocation5] sm:$0xff]
    %v62 = vld [vmem:[#allocation5 + $0x8] sm:$0xff]
    %vm63 = vcmask 130048
    %v65 = vsel %vm63, %v60, 0
    %67 = vmatpush.msra.mxu0 0.0
    %68 = vmatpush.msra.mxu0 0.0
    %69 = vmatpush.msra.mxu0 0.0
    %70 = vmatpush.msra.mxu0 0.0
    %71 = vmatpush.msra.mxu0 0.0
    %72 = vmatpush.msra.mxu0 0.0
    %73 = vmatpush.msra.mxu0 0.0
    %74 = vmatpush.msra.mxu0 0.0
    %75 = vmatpush.msra.mxu0 0.0
    %76 = vmatpush.msra.mxu0 0.0
    %77 = vmatpush.msra.mxu0 0.0
    %78 = vmatpush.msra.mxu0 0.0
    %79 = vmatpush.msra.mxu0 0.0
    %80 = vmatpush.msra.mxu0 0.0
    %81 = vmatpush.msra.mxu0 %v62
    %82 = vmatpush.msra.mxu0 %v61
    %83 = vmatmul.f32.gmra.mxu0 %v65
    %v84 = vpop.f32.mrf.mxu0
    %v85 = vadd.f32 0.0, %v84
    %86 = vdwg.mxu0
    %v87 = vld [vmem:[#allocation7] sm:$0xff]
    %v88 = vld [vmem:[#allocation7 + $0x8] sm:$0xff]
    %v89 = vld [vmem:[#allocation7 + $0x10] sm:$0xff]
    %v90 = vld [vmem:[#allocation7 + $0x18] sm:$0xff]
    %vm91 = vcmask 261120
    %v93 = vsel %vm91, 0.0, 0
    %95 = vmatpush.msra.mxu0 0.0
    %96 = vmatpush.msra.mxu0 0.0
    %97 = vmatpush.msra.mxu0 0.0
    %98 = vmatpush.msra.mxu0 0.0
    %99 = vmatpush.msra.mxu0 0.0
    %100 = vmatpush.msra.mxu0 0.0
    %101 = vmatpush.msra.mxu0 0.0
    %102 = vmatpush.msra.mxu0 0.0
    %103 = vmatpush.msra.mxu0 0.0
    %104 = vmatpush.msra.mxu0 0.0
    %105 = vmatpush.msra.mxu0 0.0
    %106 = vmatpush.msra.mxu0 0.0
    %107 = vmatpush.msra.mxu0 %v90
    %108 = vmatpush.msra.mxu0 %v89
    %109 = vmatpush.msra.mxu0 %v88
    %110 = vmatpush.msra.mxu0 %v87
    %111 = vmatmul.f32.gmra.mxu0 %v93
    %v112 = vpop.f32.mrf.mxu0
    %v113 = vadd.f32 0.0, %v112
    %114 = vdwg.mxu0
    %v115 = vadd.f32 %v85, %v113
    %v116 = vtanh.pop %v115
    %vm117 = vcmask 253952
    %118 = vst.msk [vmem:[#allocation8] sm:$0x1] %vm117, %v116
    %v120 = vsel %vm91, %v116, 0
    %122 = vmatpush.msra.mxu0 0.0
    %123 = vmatpush.msra.mxu0 0.0
    %124 = vmatpush.msra.mxu0 0.0
    %125 = vmatpush.msra.mxu0 0.0
    %126 = vmatpush.msra.mxu0 0.0
    %127 = vmatpush.msra.mxu0 0.0
    %128 = vmatpush.msra.mxu0 0.0
    %129 = vmatpush.msra.mxu0 0.0
    %130 = vmatpush.msra.mxu0 0.0
    %131 = vmatpush.msra.mxu0 0.0
    %132 = vmatpush.msra.mxu0 0.0
    %133 = vmatpush.msra.mxu0 0.0
    %134 = vmatpush.msra.mxu0 %v90
    %135 = vmatpush.msra.mxu0 %v89
    %136 = vmatpush.msra.mxu0 %v88
    %137 = vmatpush.msra.mxu0 %v87
    %138 = vmatmul.f32.gmra.mxu0 %v120
    %v139 = vpop.f32.mrf.mxu0
    %v140 = vadd.f32 0.0, %v139
    %141 = vdwg.mxu0
    %v143 = vrot.slane %v140, 7
    %v145 = vadd.f32 %v85, %v143
    %v146 = vtanh.pop %v145
    %vm147 = vcmask 254977
    %148 = vst.msk [vmem:[#allocation8] sm:$0x2] %vm147, %v146
    %v150 = vrot.slane %v146, 1
    %v151 = vsel %vm91, %v150, 0
    %153 = vmatpush.msra.mxu0 0.0
    %154 = vmatpush.msra.mxu0 0.0
    %155 = vmatpush.msra.mxu0 0.0
    %156 = vmatpush.msra.mxu0 0.0
    %157 = vmatpush.msra.mxu0 0.0
    %158 = vmatpush.msra.mxu0 0.0
    %159 = vmatpush.msra.mxu0 0.0
    %160 = vmatpush.msra.mxu0 0.0
    %161 = vmatpush.msra.mxu0 0.0
    %162 = vmatpush.msra.mxu0 0.0
    %163 = vmatpush.msra.mxu0 0.0
    %164 = vmatpush.msra.mxu0 0.0
    %165 = vmatpush.msra.mxu0 %v90
    %166 = vmatpush.msra.mxu0 %v89
    %167 = vmatpush.msra.mxu0 %v88
    %168 = vmatpush.msra.mxu0 %v87
    %169 = vmatmul.f32.gmra.mxu0 %v151
    %v170 = vpop.f32.mrf.mxu0
    %v171 = vadd.f32 0.0, %v170
    %172 = vdwg.mxu0
    %v174 = vrot.slane %v171, 6
    %v176 = vadd.f32 %v85, %v174
    %v177 = vtanh.pop %v176
    %vm178 = vcmask 256002
    %179 = vst.msk [vmem:[#allocation8] sm:$0x4] %vm178, %v177
    %v181 = vrot.slane %v177, 2
    %v182 = vsel %vm91, %v181, 0
    %184 = vmatpush.msra.mxu0 0.0
    %185 = vmatpush.msra.mxu0 0.0
    %186 = vmatpush.msra.mxu0 0.0
    %187 = vmatpush.msra.mxu0 0.0
    %188 = vmatpush.msra.mxu0 0.0
    %189 = vmatpush.msra.mxu0 0.0
    %190 = vmatpush.msra.mxu0 0.0
    %191 = vmatpush.msra.mxu0 0.0
    %192 = vmatpush.msra.mxu0 0.0
    %193 = vmatpush.msra.mxu0 0.0
    %194 = vmatpush.msra.mxu0 0.0
    %195 = vmatpush.msra.mxu0 0.0
    %196 = vmatpush.msra.mxu0 %v90
    %197 = vmatpush.msra.mxu0 %v89
    %198 = vmatpush.msra.mxu0 %v88
    %199 = vmatpush.msra.mxu0 %v87
    %200 = vmatmul.f32.gmra.mxu0 %v182
    %v201 = vpop.f32.mrf.mxu0
    %v202 = vadd.f32 0.0, %v201
    %203 = vdwg.mxu0
    %v205 = vrot.slane %v202, 5
    %v207 = vadd.f32 %v85, %v205
    %v208 = vtanh.pop %v207
    %vm209 = vcmask 257027
    %210 = vst.msk [vmem:[#allocation8] sm:$0x8] %vm209, %v208
    %v212 = vrot.slane %v208, 3
    %v213 = vsel %vm91, %v212, 0
    %215 = vmatpush.msra.mxu0 0.0
    %216 = vmatpush.msra.mxu0 0.0
    %217 = vmatpush.msra.mxu0 0.0
    %218 = vmatpush.msra.mxu0 0.0
    %219 = vmatpush.msra.mxu0 0.0
    %220 = vmatpush.msra.mxu0 0.0
    %221 = vmatpush.msra.mxu0 0.0
    %222 = vmatpush.msra.mxu0 0.0
    %223 = vmatpush.msra.mxu0 0.0
    %224 = vmatpush.msra.mxu0 0.0
    %225 = vmatpush.msra.mxu0 0.0
    %226 = vmatpush.msra.mxu0 0.0
    %227 = vmatpush.msra.mxu0 %v90
    %228 = vmatpush.msra.mxu0 %v89
    %229 = vmatpush.msra.mxu0 %v88
    %230 = vmatpush.msra.mxu0 %v87
    %231 = vmatmul.f32.gmra.mxu0 %v213
    %v232 = vpop.f32.mrf.mxu0
    %v233 = vadd.f32 0.0, %v232
    %234 = vdwg.mxu0
    %v236 = vrot.slane %v233, 4
    %v238 = vadd.f32 %v85, %v236
    %v239 = vtanh.pop %v238
    %vm240 = vcmask 258052
    %241 = vst.msk [vmem:[#allocation8] sm:$0x10] %vm240, %v239
    %v243 = vrot.slane %v239, 4
    %v244 = vsel %vm91, %v243, 0
    %246 = vmatpush.msra.mxu0 0.0
    %247 = vmatpush.msra.mxu0 0.0
    %248 = vmatpush.msra.mxu0 0.0
    %249 = vmatpush.msra.mxu0 0.0
    %250 = vmatpush.msra.mxu0 0.0
    %251 = vmatpush.msra.mxu0 0.0
    %252 = vmatpush.msra.mxu0 0.0
    %253 = vmatpush.msra.mxu0 0.0
    %254 = vmatpush.msra.mxu0 0.0
    %255 = vmatpush.msra.mxu0 0.0
    %256 = vmatpush.msra.mxu0 0.0
    %257 = vmatpush.msra.mxu0 0.0
    %258 = vmatpush.msra.mxu0 %v90
    %259 = vmatpush.msra.mxu0 %v89
    %260 = vmatpush.msra.mxu0 %v88
    %261 = vmatpush.msra.mxu0 %v87
    %262 = vmatmul.f32.gmra.mxu0 %v244
    %v263 = vpop.f32.mrf.mxu0
    %v264 = vadd.f32 0.0, %v263
    %265 = vdwg.mxu0
    %v267 = vrot.slane %v264, 3
    %v269 = vadd.f32 %v85, %v267
    %v270 = vtanh.pop %v269
    %vm271 = vcmask 259077
    %272 = vst.msk [vmem:[#allocation8] sm:$0x20] %vm271, %v270
    %v274 = vrot.slane %v270, 5
    %v275 = vsel %vm91, %v274, 0
    %277 = vmatpush.msra.mxu0 0.0
    %278 = vmatpush.msra.mxu0 0.0
    %279 = vmatpush.msra.mxu0 0.0
    %280 = vmatpush.msra.mxu0 0.0
    %281 = vmatpush.msra.mxu0 0.0
    %282 = vmatpush.msra.mxu0 0.0
    %283 = vmatpush.msra.mxu0 0.0
    %284 = vmatpush.msra.mxu0 0.0
    %285 = vmatpush.msra.mxu0 0.0
    %286 = vmatpush.msra.mxu0 0.0
    %287 = vmatpush.msra.mxu0 0.0
    %288 = vmatpush.msra.mxu0 0.0
    %289 = vmatpush.msra.mxu0 %v90
    %290 = vmatpush.msra.mxu0 %v89
    %291 = vmatpush.msra.mxu0 %v88
    %292 = vmatpush.msra.mxu0 %v87
    %293 = vmatmul.f32.gmra.mxu0 %v275
    %v294 = vpop.f32.mrf.mxu0
    %v295 = vadd.f32 0.0, %v294
    %296 = vdwg.mxu0
    %v298 = vrot.slane %v295, 2
    %v300 = vadd.f32 %v85, %v298
    %v301 = vtanh.pop %v300
    %vm302 = vcmask 260102
    %303 = vst.msk [vmem:[#allocation8] sm:$0x40] %vm302, %v301
    %v305 = vrot.slane %v301, 6
    %v306 = vsel %vm91, %v305, 0
    %308 = vmatpush.msra.mxu0 0.0
    %309 = vmatpush.msra.mxu0 0.0
    %310 = vmatpush.msra.mxu0 0.0
    %311 = vmatpush.msra.mxu0 0.0
    %312 = vmatpush.msra.mxu0 0.0
    %313 = vmatpush.msra.mxu0 0.0
    %314 = vmatpush.msra.mxu0 0.0
    %315 = vmatpush.msra.mxu0 0.0
    %316 = vmatpush.msra.mxu0 0.0
    %317 = vmatpush.msra.mxu0 0.0
    %318 = vmatpush.msra.mxu0 0.0
    %319 = vmatpush.msra.mxu0 0.0
    %320 = vmatpush.msra.mxu0 %v90
    %321 = vmatpush.msra.mxu0 %v89
    %322 = vmatpush.msra.mxu0 %v88
    %323 = vmatpush.msra.mxu0 %v87
    %324 = vmatmul.f32.gmra.mxu0 %v306
    %v325 = vpop.f32.mrf.mxu0
    %v326 = vadd.f32 0.0, %v325
    %327 = vdwg.mxu0
    %v329 = vrot.slane %v326, 1
    %v331 = vadd.f32 %v85, %v329
    %v332 = vtanh.pop %v331
    %vm333 = vcmask 261127
    %334 = vst.msk [vmem:[#allocation8] sm:$0x80] %vm333, %v332
    // Predicated region
    $region26: #{tpu_custom_call.1} parent=1 // pred_check
      _
    $region27: #{tpu_custom_call.1} parent=1 // pred_check_branch
      %336 = sbr.rel (0) target = $region29
    $region28: #{tpu_custom_call.1} parent=1 // pred_region
      %338 = vsyncadd [#allocation4], 0
      %s340 = sshll.u32 [#allocation8], 4
      %s341 = int_to_ptr.vmem [resolvable:$true] %s340
      %s342 = sshll.u32 %s3, 4
      %s343 = int_to_ptr.hbm [resolvable:$true] %s342
      %345 = dma.vmem_to_hbm [thread:$0]  %s341, 128, %s343, [#allocation4]
    $region29: #{tpu_custom_call.1} parent=1 // pred_fallthru
      _
    // Predicated region
    $region30: #{tpu_custom_call.1} parent=1 // pred_check
      _
    $region31: #{tpu_custom_call.1} parent=1 // pred_check_branch
      %347 = sbr.rel (0) target = $region33
    $region32: #{tpu_custom_call.1} parent=1 // pred_region
      %349 = dma.done [#allocation4], 128
    $region33: #{tpu_custom_call.1} parent=1 // pred_fallthru
      _
    %350 = vsyncpa [#allocation3], 1
    %351 = vsyncpa [#allocation6], 1
    %352 = vsyncpa [#allocation4], 1

</llo_original>
